<compile_context>
chip_gen: v7x
topology: tpu7x:2x2x1
jax: 0.10.0
libtpu: 0.0.40
codegen_flags: <defaults>
</compile_context>

<pallas_src>
import functools

import jax
import jax.numpy as jnp
from jax.experimental import pallas as pl
from jax.experimental.pallas import tpu as pltpu

LANE = 128  # vreg lane width


def _round_up(v, m):
    return -(-v // m) * m


def _choose_c_pad(heads, hid):
    """Per-head padded feature width.

    Prefer packing heads so heads*c_pad is exactly a multiple of 128 (no per-head blow-up of the
    resident projected features); fall back to per-head lane padding only when heads*hid < 128 or
    an exact pack is impossible.
    """
    total = heads * hid
    if total % LANE == 0:
        return hid
    padded_total = _round_up(total, LANE)
    if padded_total % heads == 0 and padded_total // heads >= hid:
        return padded_total // heads
    return _round_up(hid, LANE)


# ----------------------------------------------------------------------------
# Kernel
# ----------------------------------------------------------------------------
def _gat_layer(h_in, neg_bias, w_ref, apack_ref, bias_ref, *, heads, c_pad):
    """One GATConv layer (concat=True) with fused bias + ReLU, fully VMEM/vreg resident.

    h_in:     [N, Din] f32      input node features (value)
    w:        [Din, H*Cp] bf16  projection weight (per-head feature axis zero-padded to Cp)
    apack:    [H*Cp, 2H] bf16   cols [0,H) = a_src per head, cols [H,2H) = a_dst per head
    bias:     [1, H*Cp] f32
    neg_bias: [N, N] f32        additive attention mask: 0 on edges / self-loops, -1e30 elsewhere
    """
    # Projection and attention logits both run on the MXU with bf16 operands, f32 accumulation.
    h = jnp.dot(h_in.astype(jnp.bfloat16), w_ref[...],
                preferred_element_type=jnp.float32)                          # [N, H*Cp]
    h_bf = h.astype(jnp.bfloat16)
    alpha = jnp.dot(h_bf, apack_ref[...], preferred_element_type=jnp.float32)  # [N, 2H]
    # One XLU transpose per layer (hoisted out of the head loop).
    alpha_src_t = alpha[:, :heads].T                                          # [H, N]

    outs = []
    for hh in range(heads):  # heads is small & static -> unrolled at trace time
        hc = h_bf[:, hh * c_pad:(hh + 1) * c_pad]                             # [N, Cp] bf16
        a_d = alpha[:, heads + hh:heads + hh + 1]                             # [N, 1]  f32
        a_s = alpha_src_t[hh:hh + 1, :]                                       # [1, N]  f32
        # e[i, j] = leaky_relu(alpha_dst[i] + alpha_src[j], slope=0.2) + mask bias   (f32)
        raw = a_d + a_s                                                       # [N, N]
        e = jnp.maximum(raw, 0.2 * raw) + neg_bias
        # Masked softmax over incoming edges (source axis). add_self_loops=True guarantees every
        # destination row has >=1 unmasked entry, so masked exps underflow to 0 and denom > 0.
        m = jnp.max(e, axis=-1, keepdims=True)
        p = jnp.exp(e - m)
        denom = jnp.sum(p, axis=-1, keepdims=True)
        # Aggregate on the MXU first, normalize afterwards ([N,Cp] multiply instead of [N,N]),
        # and fuse bias + ReLU per head (no scratch round trip).
        acc = jnp.dot(p.astype(jnp.bfloat16), hc, preferred_element_type=jnp.float32)
        b_h = bias_ref[:, hh * c_pad:(hh + 1) * c_pad]
        outs.append(jnp.maximum(acc * pl.reciprocal(denom, approx=True) + b_h, 0.0))

    return outs[0] if heads == 1 else jnp.concatenate(outs, axis=-1)          # [N, H*Cp]


def fused_gat_regressor_kernel(x_ref, adj_ref, pool_ref,
                               w1_ref, apack1_ref, bias1_ref,
                               w2_ref, apack2_ref, bias2_ref,
                               rw1_ref, rb1_ref, rw2_ref, rb2_ref,
                               out_ref,
                               *, heads1, c_pad1, c_pad2):
    # Additive attention mask, computed ONCE and shared by both layers (int8 -> f32).
    neg_bias = (adj_ref[...].astype(jnp.float32) - 1.0) * 1e30                # [N, N]

    h1 = _gat_layer(x_ref[...], neg_bias, w1_ref, apack1_ref, bias1_ref,
                    heads=heads1, c_pad=c_pad1)
    h2 = _gat_layer(h1, neg_bias, w2_ref, apack2_ref, bias2_ref,
                    heads=1, c_pad=c_pad2)

    # global_mean_pool as a dense matmul with a mean-normalized one-hot matrix (kept f32).
    pooled = jnp.dot(pool_ref[...], h2, preferred_element_type=jnp.float32)   # [B, Cp2]
    hdn = jnp.maximum(
        jnp.dot(pooled.astype(jnp.bfloat16), rw1_ref[...],
                preferred_element_type=jnp.float32) + rb1_ref[...],
        0.0)                                                                  # [B, reg_pad]
    # Final Linear(hidden//2, 1): VPU mult + lane reduce (avoids a 1-lane MXU result), f32.
    out_ref[...] = jnp.sum(hdn * rw2_ref[...], axis=-1, keepdims=True) + rb2_ref[...]


# ----------------------------------------------------------------------------
# Wrapper
# ----------------------------------------------------------------------------
def _full_spec(shape):
    return pl.BlockSpec(shape, lambda i: (0,) * len(shape))


def gat_regressor_forward(padded, x, adj_i8, pool):
    b = pool.shape[0]

    kernel = functools.partial(fused_gat_regressor_kernel,
                               heads1=padded["heads1"],
                               c_pad1=padded["c_pad1"],
                               c_pad2=padded["c_pad2"])
    args = (x, adj_i8, pool,
            padded["w1"], padded["apack1"], padded["bias1"],
            padded["w2"], padded["apack2"], padded["bias2"],
            padded["rw1"], padded["rb1"], padded["rw2"], padded["rb2"])

    out = pl.pallas_call(
        kernel,
        out_shape=jax.ShapeDtypeStruct((b, 1), jnp.float32),
        grid=(1,),
        in_specs=[_full_spec(a.shape) for a in args],
        out_specs=_full_spec((b, 1)),
        # TODO(synk): for the dst-row-tiled version set vmem_limit_bytes explicitly (v5e scoped
        # default is 16 MiB) and mark the dst axis "parallel" for v7x's 2 TensorCores.
        compiler_params=pltpu.CompilerParams(dimension_semantics=("arbitrary",)),
    )(*args)
    return out.reshape(-1)  # matches out.view(-1)


def prepare_padded_params(p):
    """Pad feature axes lane-dense, prebuild the a-packs, and pre-cast MXU weights to bf16."""
    heads1 = p["heads1"]
    hid = p["hidden"]
    hid2 = p["rw1"].shape[1]  # hidden // 2
    c_pad1 = _choose_c_pad(heads1, hid)
    c_pad2 = _choose_c_pad(1, hid)
    reg_pad = _round_up(hid2, LANE)

    def pad_head_cols(w, heads, c, c_pad):
        # [Din, heads*c] -> [Din, heads*c_pad]: per-head zero pad of the feature axis
        w = w.reshape(w.shape[0], heads, c)
        w = jnp.pad(w, ((0, 0), (0, 0), (0, c_pad - c)))
        return w.reshape(w.shape[0], heads * c_pad)

    def pad_head_rows(w, heads, c, c_pad):
        # [heads*c, Dout] -> [heads*c_pad, Dout]
        w = w.reshape(heads, c, w.shape[-1])
        w = jnp.pad(w, ((0, 0), (0, c_pad - c), (0, 0)))
        return w.reshape(heads * c_pad, w.shape[-1])

    def make_apack(a_src, a_dst, heads, c, c_pad):
        # [heads*c_pad, 2*heads]: col h <- a_src[h], col heads+h <- a_dst[h] (block-diag per head)
        ap = jnp.zeros((heads * c_pad, 2 * heads), jnp.float32)
        for hh in range(heads):
            ap = ap.at[hh * c_pad:hh * c_pad + c, hh].set(a_src[hh])
            ap = ap.at[hh * c_pad:hh * c_pad + c, heads + hh].set(a_dst[hh])
        return ap

    bf = lambda a: a.astype(jnp.bfloat16)

    return {
        "heads1": heads1,
        "c_pad1": c_pad1,
        "c_pad2": c_pad2,
        # gat1
        "w1": bf(pad_head_cols(p["w1"], heads1, hid, c_pad1)),
        "apack1": bf(make_apack(p["a1_src"], p["a1_dst"], heads1, hid, c_pad1)),
        "bias1": pad_head_cols(p["bias1"], heads1, hid, c_pad1),
        # gat2 consumes the head-padded layer-1 output -> pad its input rows to match
        "w2": bf(pad_head_cols(pad_head_rows(p["w2"], heads1, hid, c_pad1), 1, hid, c_pad2)),
        "apack2": bf(make_apack(p["a2_src"], p["a2_dst"], 1, hid, c_pad2)),
        "bias2": pad_head_cols(p["bias2"], 1, hid, c_pad2),
        # regressor
        "rw1": bf(jnp.pad(p["rw1"], ((0, c_pad2 - hid), (0, reg_pad - hid2)))),
        "rb1": jnp.pad(p["rb1"], ((0, 0), (0, reg_pad - hid2))),
        "rw2": jnp.pad(p["rw2"].T, ((0, 0), (0, reg_pad - hid2))),  # [1, reg_pad] for VPU reduce
        "rb2": p["rb2"],
    }


# ----------------------------------------------------------------------------
# Pure-JAX reference (same math, unpadded, f32, no Pallas) for a correctness check
# ----------------------------------------------------------------------------
def _gat_ref(x, w, a_src, a_dst, bias, adj, heads, out_ch):
    h = x @ w
    outs = []
    for hh in range(heads):
        hc = h[:, hh * out_ch:(hh + 1) * out_ch]
        a_s = jnp.sum(hc * a_src[hh][None, :], axis=-1)
        a_d = jnp.sum(hc * a_dst[hh][None, :], axis=-1)
        e = a_d[:, None] + a_s[None, :]
        e = jnp.where(e > 0.0, e, 0.2 * e)
        e = jnp.where(adj > 0.0, e, -1e30)
        attn = jax.nn.softmax(e, axis=-1)
        attn = jnp.where(adj > 0.0, attn, 0.0)
        outs.append(attn @ hc)
    return jax.nn.relu(jnp.concatenate(outs, axis=-1) + bias.reshape(-1))


def _ref_forward(params, x, adj, pool):
    p = params
    h1 = _gat_ref(x, p["w1"], p["a1_src"], p["a1_dst"], p["bias1"], adj, p["heads1"], p["hidden"])
    h2 = _gat_ref(h1, p["w2"], p["a2_src"], p["a2_dst"], p["bias2"], adj, 1, p["hidden"])
    pooled = pool @ h2
    hdn = jax.nn.relu(pooled @ p["rw1"] + p["rb1"])
    return (hdn @ p["rw2"] + p["rb2"]).reshape(-1)


# ----------------------------------------------------------------------------
# Main
# ----------------------------------------------------------------------------
if __name__ == "__main__":
    key = jax.random.PRNGKey(0)

    # Problem sizes (small, consistent with the module's forward)
    N = 16              # total nodes across all graphs
    B = 2               # graphs in the batch
    IN_CH = 8           # in_channels
    HID = 32            # hidden_channels
    HEADS = 1           # heads (module default)

    keys = jax.random.split(key, 12)

    # Node features, adjacency (dense mask, directed, self loops added), batch vector.
    x = jax.random.normal(keys[0], (N, IN_CH), dtype=jnp.float32)
    adj = (jax.random.uniform(keys[1], (N, N)) < 0.3).astype(jnp.float32)
    adj = jnp.maximum(adj, jnp.eye(N, dtype=jnp.float32))   # add_self_loops=True (required: row-wise denom > 0)
    adj_i8 = adj.astype(jnp.int8)                           # int8 mask for the kernel (4x less DMA)
    batch = jnp.concatenate([jnp.zeros(N // 2, jnp.int32), jnp.ones(N - N // 2, jnp.int32)])

    # Mean-pool matrix [B, N]
    onehot = (batch[None, :] == jnp.arange(B, dtype=jnp.int32)[:, None]).astype(jnp.float32)
    pool = onehot / jnp.sum(onehot, axis=1, keepdims=True)

    # Deterministic parameter init (shapes follow GATConv / nn.Linear in __init__)
    s = 0.1
    params = {
        "heads1": HEADS,
        "hidden": HID,
        # gat1: in_channels -> hidden_channels, heads=HEADS, concat=True
        "w1": s * jax.random.normal(keys[2], (IN_CH, HEADS * HID), jnp.float32),
        "a1_src": s * jax.random.normal(keys[3], (HEADS, HID), jnp.float32),
        "a1_dst": s * jax.random.normal(keys[4], (HEADS, HID), jnp.float32),
        "bias1": s * jax.random.normal(keys[5], (1, HEADS * HID), jnp.float32),
        # gat2: hidden*heads -> hidden, heads=1, concat=True
        "w2": s * jax.random.normal(keys[6], (HEADS * HID, HID), jnp.float32),
        "a2_src": s * jax.random.normal(keys[7], (1, HID), jnp.float32),
        "a2_dst": s * jax.random.normal(keys[8], (1, HID), jnp.float32),
        "bias2": s * jax.random.normal(keys[9], (1, HID), jnp.float32),
        # regressor: Linear(hidden, hidden//2) -> ReLU -> Linear(hidden//2, 1)
        "rw1": s * jax.random.normal(keys[10], (HID, HID // 2), jnp.float32),
        "rb1": jnp.zeros((1, HID // 2), jnp.float32),
        "rw2": s * jax.random.normal(keys[11], (HID // 2, 1), jnp.float32),
        "rb2": jnp.zeros((1, 1), jnp.float32),
    }

    padded = prepare_padded_params(params)          # one-time, host-side weight padding/packing

    out = gat_regressor_forward(padded, x, adj_i8, pool)
    out = jax.block_until_ready(out)

    ref = _ref_forward(params, x, adj, pool)
    assert out.shape == (B,), f"expected shape ({B},), got {out.shape}"
    # Tolerance accounts for bf16 MXU operands (f32 accumulation, f32 softmax) and the EUP
    # approximate reciprocal in the softmax normalization.
    assert jnp.allclose(out, ref, atol=2e-2, rtol=5e-2), (out, ref)

    print("KERNEL_OK")
</pallas_src>

<mosaic_0001>
module attributes {stable_mosaic.version = 11 : i64} {
  func.func @fused_gat_regressor_kernel(%arg0: i32, %arg1: memref<16x8xf32, #tpu.memory_space<vmem>>, %arg2: memref<16x16xi8, #tpu.memory_space<vmem>>, %arg3: memref<2x16xf32, #tpu.memory_space<vmem>>, %arg4: memref<8x128xbf16, #tpu.memory_space<vmem>>, %arg5: memref<128x2xbf16, #tpu.memory_space<vmem>>, %arg6: memref<1x128xf32, #tpu.memory_space<vmem>>, %arg7: memref<128x128xbf16, #tpu.memory_space<vmem>>, %arg8: memref<128x2xbf16, #tpu.memory_space<vmem>>, %arg9: memref<1x128xf32, #tpu.memory_space<vmem>>, %arg10: memref<128x128xbf16, #tpu.memory_space<vmem>>, %arg11: memref<1x128xf32, #tpu.memory_space<vmem>>, %arg12: memref<1x128xf32, #tpu.memory_space<vmem>>, %arg13: memref<1x1xf32, #tpu.memory_space<vmem>>, %arg14: memref<2x1xf32, #tpu.memory_space<vmem>>) attributes {dimension_semantics = [#tpu.dimension_semantics<arbitrary>], iteration_bounds = array<i64: 1>, scalar_prefetch = 0 : i64, scratch_operands = 0 : i64, tpu.core_type = #tpu.core_type<tc>, window_params = [{pipeline_mode = #tpu.pipeline_mode<synchronous>, transform_indices = @transform_0, window_bounds = array<i64: 16, 8>}, {pipeline_mode = #tpu.pipeline_mode<synchronous>, transform_indices = @transform_1, window_bounds = array<i64: 16, 16>}, {pipeline_mode = #tpu.pipeline_mode<synchronous>, transform_indices = @transform_2, window_bounds = array<i64: 2, 16>}, {pipeline_mode = #tpu.pipeline_mode<synchronous>, transform_indices = @transform_3, window_bounds = array<i64: 8, 128>}, {pipeline_mode = #tpu.pipeline_mode<synchronous>, transform_indices = @transform_4, window_bounds = array<i64: 128, 2>}, {pipeline_mode = #tpu.pipeline_mode<synchronous>, transform_indices = @transform_5, window_bounds = array<i64: 1, 128>}, {pipeline_mode = #tpu.pipeline_mode<synchronous>, transform_indices = @transform_6, window_bounds = array<i64: 128, 128>}, {pipeline_mode = #tpu.pipeline_mode<synchronous>, transform_indices = @transform_7, window_bounds = array<i64: 128, 2>}, {pipeline_mode = #tpu.pipeline_mode<synchronous>, transform_indices = @transform_8, window_bounds = array<i64: 1, 128>}, {pipeline_mode = #tpu.pipeline_mode<synchronous>, transform_indices = @transform_9, window_bounds = array<i64: 128, 128>}, {pipeline_mode = #tpu.pipeline_mode<synchronous>, transform_indices = @transform_10, window_bounds = array<i64: 1, 128>}, {pipeline_mode = #tpu.pipeline_mode<synchronous>, transform_indices = @transform_11, window_bounds = array<i64: 1, 128>}, {pipeline_mode = #tpu.pipeline_mode<synchronous>, transform_indices = @transform_12, window_bounds = array<i64: 1, 1>}, {pipeline_mode = #tpu.pipeline_mode<synchronous>, transform_indices = @transform_13, window_bounds = array<i64: 2, 1>}]} {
    %c0 = arith.constant 0 : index
    %c0_0 = arith.constant 0 : index
    %0 = vector.load %arg2[%c0, %c0_0] : memref<16x16xi8, #tpu.memory_space<vmem>>, vector<16x16xi8>
    %1 = arith.sitofp %0 : vector<16x16xi8> to vector<16x16xf32>
    %cst = arith.constant 1.000000e+00 : f32
    %2 = vector.broadcast %cst : f32 to vector<16x16xf32>
    %3 = arith.subf %1, %2 : vector<16x16xf32>
    %cst_1 = arith.constant 1.000000e+30 : f32
    %4 = vector.broadcast %cst_1 : f32 to vector<16x16xf32>
    %5 = arith.mulf %3, %4 : vector<16x16xf32>
    %c0_2 = arith.constant 0 : index
    %c0_3 = arith.constant 0 : index
    %6 = vector.load %arg1[%c0_2, %c0_3] : memref<16x8xf32, #tpu.memory_space<vmem>>, vector<16x8xf32>
    %7 = arith.truncf %6 : vector<16x8xf32> to vector<16x8xbf16>
    %c0_4 = arith.constant 0 : index
    %c0_5 = arith.constant 0 : index
    %8 = vector.load %arg4[%c0_4, %c0_5] : memref<8x128xbf16, #tpu.memory_space<vmem>>, vector<8x128xbf16>
    %cst_6 = arith.constant dense<0.000000e+00> : vector<16x128xf32>
    %9 = tpu.matmul %7, %8, %cst_6 {dimension_numbers = #tpu.dot_dimension_numbers<[1], [0], [0], [1], [0, 0, 1, 1], [], []>} : vector<16x8xbf16>, vector<8x128xbf16>, vector<16x128xf32> -> vector<16x128xf32>
    %10 = arith.truncf %9 : vector<16x128xf32> to vector<16x128xbf16>
    %c0_7 = arith.constant 0 : index
    %c0_8 = arith.constant 0 : index
    %11 = vector.load %arg5[%c0_7, %c0_8] : memref<128x2xbf16, #tpu.memory_space<vmem>>, vector<128x2xbf16>
    %cst_9 = arith.constant dense<0.000000e+00> : vector<16x2xf32>
    %12 = tpu.matmul %10, %11, %cst_9 {dimension_numbers = #tpu.dot_dimension_numbers<[1], [0], [0], [1], [0, 0, 1, 1], [], []>} : vector<16x128xbf16>, vector<128x2xbf16>, vector<16x2xf32> -> vector<16x2xf32>
    %13 = vector.extract_strided_slice %12 {offsets = [0, 0], sizes = [16, 1], strides = [1, 1]} : vector<16x2xf32> to vector<16x1xf32>
    %14 = tpu.transpose %13, [1, 0] : vector<16x1xf32> -> vector<1x16xf32>
    %15 = vector.extract_strided_slice %12 {offsets = [0, 1], sizes = [16, 1], strides = [1, 1]} : vector<16x2xf32> to vector<16x1xf32>
    %16 = vector.broadcast %15 : vector<16x1xf32> to vector<16x16xf32>
    %17 = vector.broadcast %14 : vector<1x16xf32> to vector<16x16xf32>
    %18 = arith.addf %16, %17 : vector<16x16xf32>
    %cst_10 = arith.constant 2.000000e-01 : f32
    %19 = vector.broadcast %cst_10 : f32 to vector<16x16xf32>
    %20 = arith.mulf %19, %18 : vector<16x16xf32>
    %21 = arith.maximumf %18, %20 : vector<16x16xf32>
    %22 = arith.addf %21, %5 : vector<16x16xf32>
    %cst_11 = arith.constant dense<0xFF800000> : vector<16xf32>
    %23 = vector.multi_reduction <maximumf>, %22, %cst_11 [1] : vector<16x16xf32> to vector<16xf32>
    %24 = vector.shape_cast %23 : vector<16xf32> to vector<16x1xf32>
    %25 = vector.broadcast %24 : vector<16x1xf32> to vector<16x16xf32>
    %26 = arith.subf %22, %25 : vector<16x16xf32>
    %27 = math.exp %26 : vector<16x16xf32>
    %cst_12 = arith.constant dense<0.000000e+00> : vector<16xf32>
    %28 = vector.multi_reduction <add>, %27, %cst_12 [1] : vector<16x16xf32> to vector<16xf32>
    %29 = vector.shape_cast %28 : vector<16xf32> to vector<16x1xf32>
    %30 = arith.truncf %27 : vector<16x16xf32> to vector<16x16xbf16>
    %cst_13 = arith.constant dense<0.000000e+00> : vector<16x128xf32>
    %31 = tpu.matmul %30, %10, %cst_13 {dimension_numbers = #tpu.dot_dimension_numbers<[1], [0], [0], [1], [0, 0, 1, 1], [], []>} : vector<16x16xbf16>, vector<16x128xbf16>, vector<16x128xf32> -> vector<16x128xf32>
    %c0_14 = arith.constant 0 : index
    %c0_15 = arith.constant 0 : index
    %32 = vector.load %arg6[%c0_14, %c0_15] : memref<1x128xf32, #tpu.memory_space<vmem>>, vector<1x128xf32>
    %33 = tpu.reciprocal %29 {approx = true} : vector<16x1xf32> -> vector<16x1xf32>
    %34 = vector.broadcast %33 : vector<16x1xf32> to vector<16x128xf32>
    %35 = arith.mulf %31, %34 : vector<16x128xf32>
    %36 = vector.broadcast %32 : vector<1x128xf32> to vector<16x128xf32>
    %37 = arith.addf %35, %36 : vector<16x128xf32>
    %cst_16 = arith.constant 0.000000e+00 : f32
    %38 = vector.broadcast %cst_16 : f32 to vector<16x128xf32>
    %39 = arith.maximumf %37, %38 : vector<16x128xf32>
    %40 = arith.truncf %39 : vector<16x128xf32> to vector<16x128xbf16>
    %c0_17 = arith.constant 0 : index
    %c0_18 = arith.constant 0 : index
    %41 = vector.load %arg7[%c0_17, %c0_18] : memref<128x128xbf16, #tpu.memory_space<vmem>>, vector<128x128xbf16>
    %cst_19 = arith.constant dense<0.000000e+00> : vector<16x128xf32>
    %42 = tpu.matmul %40, %41, %cst_19 {dimension_numbers = #tpu.dot_dimension_numbers<[1], [0], [0], [1], [0, 0, 1, 1], [], []>} : vector<16x128xbf16>, vector<128x128xbf16>, vector<16x128xf32> -> vector<16x128xf32>
    %43 = arith.truncf %42 : vector<16x128xf32> to vector<16x128xbf16>
    %c0_20 = arith.constant 0 : index
    %c0_21 = arith.constant 0 : index
    %44 = vector.load %arg8[%c0_20, %c0_21] : memref<128x2xbf16, #tpu.memory_space<vmem>>, vector<128x2xbf16>
    %cst_22 = arith.constant dense<0.000000e+00> : vector<16x2xf32>
    %45 = tpu.matmul %43, %44, %cst_22 {dimension_numbers = #tpu.dot_dimension_numbers<[1], [0], [0], [1], [0, 0, 1, 1], [], []>} : vector<16x128xbf16>, vector<128x2xbf16>, vector<16x2xf32> -> vector<16x2xf32>
    %46 = vector.extract_strided_slice %45 {offsets = [0, 0], sizes = [16, 1], strides = [1, 1]} : vector<16x2xf32> to vector<16x1xf32>
    %47 = tpu.transpose %46, [1, 0] : vector<16x1xf32> -> vector<1x16xf32>
    %48 = vector.extract_strided_slice %45 {offsets = [0, 1], sizes = [16, 1], strides = [1, 1]} : vector<16x2xf32> to vector<16x1xf32>
    %49 = vector.broadcast %48 : vector<16x1xf32> to vector<16x16xf32>
    %50 = vector.broadcast %47 : vector<1x16xf32> to vector<16x16xf32>
    %51 = arith.addf %49, %50 : vector<16x16xf32>
    %cst_23 = arith.constant 2.000000e-01 : f32
    %52 = vector.broadcast %cst_23 : f32 to vector<16x16xf32>
    %53 = arith.mulf %52, %51 : vector<16x16xf32>
    %54 = arith.maximumf %51, %53 : vector<16x16xf32>
    %55 = arith.addf %54, %5 : vector<16x16xf32>
    %cst_24 = arith.constant dense<0xFF800000> : vector<16xf32>
    %56 = vector.multi_reduction <maximumf>, %55, %cst_24 [1] : vector<16x16xf32> to vector<16xf32>
    %57 = vector.shape_cast %56 : vector<16xf32> to vector<16x1xf32>
    %58 = vector.broadcast %57 : vector<16x1xf32> to vector<16x16xf32>
    %59 = arith.subf %55, %58 : vector<16x16xf32>
    %60 = math.exp %59 : vector<16x16xf32>
    %cst_25 = arith.constant dense<0.000000e+00> : vector<16xf32>
    %61 = vector.multi_reduction <add>, %60, %cst_25 [1] : vector<16x16xf32> to vector<16xf32>
    %62 = vector.shape_cast %61 : vector<16xf32> to vector<16x1xf32>
    %63 = arith.truncf %60 : vector<16x16xf32> to vector<16x16xbf16>
    %cst_26 = arith.constant dense<0.000000e+00> : vector<16x128xf32>
    %64 = tpu.matmul %63, %43, %cst_26 {dimension_numbers = #tpu.dot_dimension_numbers<[1], [0], [0], [1], [0, 0, 1, 1], [], []>} : vector<16x16xbf16>, vector<16x128xbf16>, vector<16x128xf32> -> vector<16x128xf32>
    %c0_27 = arith.constant 0 : index
    %c0_28 = arith.constant 0 : index
    %65 = vector.load %arg9[%c0_27, %c0_28] : memref<1x128xf32, #tpu.memory_space<vmem>>, vector<1x128xf32>
    %66 = tpu.reciprocal %62 {approx = true} : vector<16x1xf32> -> vector<16x1xf32>
    %67 = vector.broadcast %66 : vector<16x1xf32> to vector<16x128xf32>
    %68 = arith.mulf %64, %67 : vector<16x128xf32>
    %69 = vector.broadcast %65 : vector<1x128xf32> to vector<16x128xf32>
    %70 = arith.addf %68, %69 : vector<16x128xf32>
    %cst_29 = arith.constant 0.000000e+00 : f32
    %71 = vector.broadcast %cst_29 : f32 to vector<16x128xf32>
    %72 = arith.maximumf %70, %71 : vector<16x128xf32>
    %c0_30 = arith.constant 0 : index
    %c0_31 = arith.constant 0 : index
    %73 = vector.load %arg3[%c0_30, %c0_31] : memref<2x16xf32, #tpu.memory_space<vmem>>, vector<2x16xf32>
    %cst_32 = arith.constant dense<0.000000e+00> : vector<2x128xf32>
    %74 = tpu.matmul %73, %72, %cst_32 {dimension_numbers = #tpu.dot_dimension_numbers<[1], [0], [0], [1], [0, 0, 1, 1], [], []>} : vector<2x16xf32>, vector<16x128xf32>, vector<2x128xf32> -> vector<2x128xf32>
    %75 = arith.truncf %74 : vector<2x128xf32> to vector<2x128xbf16>
    %c0_33 = arith.constant 0 : index
    %c0_34 = arith.constant 0 : index
    %76 = vector.load %arg10[%c0_33, %c0_34] : memref<128x128xbf16, #tpu.memory_space<vmem>>, vector<128x128xbf16>
    %cst_35 = arith.constant dense<0.000000e+00> : vector<2x128xf32>
    %77 = tpu.matmul %75, %76, %cst_35 {dimension_numbers = #tpu.dot_dimension_numbers<[1], [0], [0], [1], [0, 0, 1, 1], [], []>} : vector<2x128xbf16>, vector<128x128xbf16>, vector<2x128xf32> -> vector<2x128xf32>
    %c0_36 = arith.constant 0 : index
    %c0_37 = arith.constant 0 : index
    %78 = vector.load %arg11[%c0_36, %c0_37] : memref<1x128xf32, #tpu.memory_space<vmem>>, vector<1x128xf32>
    %79 = vector.broadcast %78 : vector<1x128xf32> to vector<2x128xf32>
    %80 = arith.addf %77, %79 : vector<2x128xf32>
    %cst_38 = arith.constant 0.000000e+00 : f32
    %81 = vector.broadcast %cst_38 : f32 to vector<2x128xf32>
    %82 = arith.maximumf %80, %81 : vector<2x128xf32>
    %c0_39 = arith.constant 0 : index
    %c0_40 = arith.constant 0 : index
    %83 = vector.load %arg12[%c0_39, %c0_40] : memref<1x128xf32, #tpu.memory_space<vmem>>, vector<1x128xf32>
    %84 = vector.broadcast %83 : vector<1x128xf32> to vector<2x128xf32>
    %85 = arith.mulf %82, %84 : vector<2x128xf32>
    %cst_41 = arith.constant dense<0.000000e+00> : vector<2xf32>
    %86 = vector.multi_reduction <add>, %85, %cst_41 [1] : vector<2x128xf32> to vector<2xf32>
    %87 = vector.shape_cast %86 : vector<2xf32> to vector<2x1xf32>
    %c0_42 = arith.constant 0 : index
    %c0_43 = arith.constant 0 : index
    %88 = vector.load %arg13[%c0_42, %c0_43] : memref<1x1xf32, #tpu.memory_space<vmem>>, vector<1x1xf32>
    %89 = vector.broadcast %88 : vector<1x1xf32> to vector<2x1xf32>
    %90 = arith.addf %87, %89 : vector<2x1xf32>
    %c0_44 = arith.constant 0 : index
    %c0_45 = arith.constant 0 : index
    %91 = vector.load %arg14[%c0_44, %c0_45] : memref<2x1xf32, #tpu.memory_space<vmem>>, vector<2x1xf32>
    tpu.vector_store %arg14[%c0_44, %c0_45], %90 {strides = array<i32>} : memref<2x1xf32, #tpu.memory_space<vmem>>, vector<2x1xf32>,
    return
  }
  func.func @transform_0(%arg0: i32) -> (i32, i32) {
    %c0_i32 = arith.constant 0 : i32
    %c0_i32_0 = arith.constant 0 : i32
    %c0_i32_1 = arith.constant 0 : i32
    return %c0_i32, %c0_i32_0 : i32, i32
  }
  func.func @transform_1(%arg0: i32) -> (i32, i32) {
    %c0_i32 = arith.constant 0 : i32
    %c0_i32_0 = arith.constant 0 : i32
    %c0_i32_1 = arith.constant 0 : i32
    return %c0_i32, %c0_i32_0 : i32, i32
  }
  func.func @transform_2(%arg0: i32) -> (i32, i32) {
    %c0_i32 = arith.constant 0 : i32
    %c0_i32_0 = arith.constant 0 : i32
    %c0_i32_1 = arith.constant 0 : i32
    return %c0_i32, %c0_i32_0 : i32, i32
  }
  func.func @transform_3(%arg0: i32) -> (i32, i32) {
    %c0_i32 = arith.constant 0 : i32
    %c0_i32_0 = arith.constant 0 : i32
    %c0_i32_1 = arith.constant 0 : i32
    return %c0_i32, %c0_i32_0 : i32, i32
  }
  func.func @transform_4(%arg0: i32) -> (i32, i32) {
    %c0_i32 = arith.constant 0 : i32
    %c0_i32_0 = arith.constant 0 : i32
    %c0_i32_1 = arith.constant 0 : i32
    return %c0_i32, %c0_i32_0 : i32, i32
  }
  func.func @transform_5(%arg0: i32) -> (i32, i32) {
    %c0_i32 = arith.constant 0 : i32
    %c0_i32_0 = arith.constant 0 : i32
    %c0_i32_1 = arith.constant 0 : i32
    return %c0_i32, %c0_i32_0 : i32, i32
  }
  func.func @transform_6(%arg0: i32) -> (i32, i32) {
    %c0_i32 = arith.constant 0 : i32
    %c0_i32_0 = arith.constant 0 : i32
    %c0_i32_1 = arith.constant 0 : i32
    return %c0_i32, %c0_i32_0 : i32, i32
  }
  func.func @transform_7(%arg0: i32) -> (i32, i32) {
    %c0_i32 = arith.constant 0 : i32
    %c0_i32_0 = arith.constant 0 : i32
    %c0_i32_1 = arith.constant 0 : i32
    return %c0_i32, %c0_i32_0 : i32, i32
  }
  func.func @transform_8(%arg0: i32) -> (i32, i32) {
    %c0_i32 = arith.constant 0 : i32
    %c0_i32_0 = arith.constant 0 : i32
    %c0_i32_1 = arith.constant 0 : i32
    return %c0_i32, %c0_i32_0 : i32, i32
  }
  func.func @transform_9(%arg0: i32) -> (i32, i32) {
    %c0_i32 = arith.constant 0 : i32
    %c0_i32_0 = arith.constant 0 : i32
    %c0_i32_1 = arith.constant 0 : i32
    return %c0_i32, %c0_i32_0 : i32, i32
  }
  func.func @transform_10(%arg0: i32) -> (i32, i32) {
    %c0_i32 = arith.constant 0 : i32
    %c0_i32_0 = arith.constant 0 : i32
    %c0_i32_1 = arith.constant 0 : i32
    return %c0_i32, %c0_i32_0 : i32, i32
  }
  func.func @transform_11(%arg0: i32) -> (i32, i32) {
    %c0_i32 = arith.constant 0 : i32
    %c0_i32_0 = arith.constant 0 : i32
    %c0_i32_1 = arith.constant 0 : i32
    return %c0_i32, %c0_i32_0 : i32, i32
  }
  func.func @transform_12(%arg0: i32) -> (i32, i32) {
    %c0_i32 = arith.constant 0 : i32
    %c0_i32_0 = arith.constant 0 : i32
    %c0_i32_1 = arith.constant 0 : i32
    return %c0_i32, %c0_i32_0 : i32, i32
  }
  func.func @transform_13(%arg0: i32) -> (i32, i32) {
    %c0_i32 = arith.constant 0 : i32
    %c0_i32_0 = arith.constant 0 : i32
    %c0_i32_1 = arith.constant 0 : i32
    return %c0_i32, %c0_i32_0 : i32, i32
  }
}

</mosaic_0001>

<llo_original>
// kernel: tpu_custom_call.1
$region0: #{tpu_custom_call.1}
  #allocation0 [shape = 'u32[]', space=smem, size = 0x4, offset = 0x4, fixed_abs, tag = 'smem constant byte address 0x4 - core index']
  #allocation1 [shape = 'u32[144,128]{1,0:T(1,128)}', space=vmem, size = 0x12000, scoped, tag = 'internal scratch']
  #allocation2 [shape = 'f32[1,1]{1,0:T(1,128)S(1)}', space=vmem, size = 0x200, scoped, tag = 'scoped memory for tpu_custom_call.1']
  %s0 = inlined_call_operand.vmem [shape: f32[16,8], index: 0, kind: input, shape index: {}]
  %s1 = inlined_call_operand.vmem [shape: s8[16,16], index: 1, kind: input, shape index: {}]
  %s2 = inlined_call_operand.vmem [shape: f32[2,16], index: 2, kind: input, shape index: {}]
  %s3 = inlined_call_operand.vmem [shape: bf16[8,128], index: 3, kind: input, shape index: {}]
  %s4 = inlined_call_operand.vmem [shape: bf16[128,2], index: 4, kind: input, shape index: {}]
  %s5 = inlined_call_operand.vmem [shape: f32[1,128], index: 5, kind: input, shape index: {}]
  %s6 = inlined_call_operand.vmem [shape: bf16[128,128], index: 6, kind: input, shape index: {}]
  %s7 = inlined_call_operand.vmem [shape: bf16[128,2], index: 7, kind: input, shape index: {}]
  %s8 = inlined_call_operand.vmem [shape: f32[1,128], index: 8, kind: input, shape index: {}]
  %s9 = inlined_call_operand.vmem [shape: bf16[128,128], index: 9, kind: input, shape index: {}]
  %s10 = inlined_call_operand.vmem [shape: f32[1,128], index: 10, kind: input, shape index: {}]
  %s11 = inlined_call_operand.vmem [shape: f32[1,128], index: 11, kind: input, shape index: {}]
  %s12 = inlined_call_operand.<no memory space> [shape: f32[1,1], index: 12, kind: input, shape index: {}]
  %s13 = inlined_call_operand.vmem [shape: f32[2,1], index: 13, kind: output, shape index: {}]
  %s14 = sld [smem:[#allocation0]]
  $region62: #{tpu_custom_call.1} parent=0
    _
  %s16 = ssub.s32 1, %s14
  %s17 = scalar_select 0, %s16, %s14
  %v18 = vstv %s12
  %19 = vst [vmem:[#allocation2] sm:$0x1] %v18
  // Predicated region
  $region2: #{tpu_custom_call.1} parent=0 // pred_check
    _
  $region3: #{tpu_custom_call.1} parent=0 // pred_check_branch
    %21 = sbr.rel (0) target = $region5
  $region4: #{tpu_custom_call.1} parent=0 // pred_region
    _
  $region5: #{tpu_custom_call.1} parent=0 // pred_fallthru
    _
  // Predicated region
  $region6: #{tpu_custom_call.1} parent=0 // pred_check
    _
  $region7: #{tpu_custom_call.1} parent=0 // pred_check_branch
    %23 = sbr.rel (0) target = $region9
  $region8: #{tpu_custom_call.1} parent=0 // pred_region
    _
  $region9: #{tpu_custom_call.1} parent=0 // pred_fallthru
    _
  // Predicated region
  $region10: #{tpu_custom_call.1} parent=0 // pred_check
    _
  $region11: #{tpu_custom_call.1} parent=0 // pred_check_branch
    %25 = sbr.rel (0) target = $region13
  $region12: #{tpu_custom_call.1} parent=0 // pred_region
    _
  $region13: #{tpu_custom_call.1} parent=0 // pred_fallthru
    _
  // Predicated region
  $region14: #{tpu_custom_call.1} parent=0 // pred_check
    _
  $region15: #{tpu_custom_call.1} parent=0 // pred_check_branch
    %27 = sbr.rel (0) target = $region17
  $region16: #{tpu_custom_call.1} parent=0 // pred_region
    _
  $region17: #{tpu_custom_call.1} parent=0 // pred_fallthru
    _
  // Predicated region
  $region18: #{tpu_custom_call.1} parent=0 // pred_check
    _
  $region19: #{tpu_custom_call.1} parent=0 // pred_check_branch
    %29 = sbr.rel (0) target = $region21
  $region20: #{tpu_custom_call.1} parent=0 // pred_region
    _
  $region21: #{tpu_custom_call.1} parent=0 // pred_fallthru
    _
  // Predicated region
  $region22: #{tpu_custom_call.1} parent=0 // pred_check
    _
  $region23: #{tpu_custom_call.1} parent=0 // pred_check_branch
    %31 = sbr.rel (0) target = $region25
  $region24: #{tpu_custom_call.1} parent=0 // pred_region
    _
  $region25: #{tpu_custom_call.1} parent=0 // pred_fallthru
    _
  // Predicated region
  $region26: #{tpu_custom_call.1} parent=0 // pred_check
    _
  $region27: #{tpu_custom_call.1} parent=0 // pred_check_branch
    %33 = sbr.rel (0) target = $region29
  $region28: #{tpu_custom_call.1} parent=0 // pred_region
    _
  $region29: #{tpu_custom_call.1} parent=0 // pred_fallthru
    _
  // Predicated region
  $region30: #{tpu_custom_call.1} parent=0 // pred_check
    _
  $region31: #{tpu_custom_call.1} parent=0 // pred_check_branch
    %35 = sbr.rel (0) target = $region33
  $region32: #{tpu_custom_call.1} parent=0 // pred_region
    _
  $region33: #{tpu_custom_call.1} parent=0 // pred_fallthru
    _
  // Predicated region
  $region34: #{tpu_custom_call.1} parent=0 // pred_check
    _
  $region35: #{tpu_custom_call.1} parent=0 // pred_check_branch
    %37 = sbr.rel (0) target = $region37
  $region36: #{tpu_custom_call.1} parent=0 // pred_region
    _
  $region37: #{tpu_custom_call.1} parent=0 // pred_fallthru
    _
  // Predicated region
  $region38: #{tpu_custom_call.1} parent=0 // pred_check
    _
  $region39: #{tpu_custom_call.1} parent=0 // pred_check_branch
    %39 = sbr.rel (0) target = $region41
  $region40: #{tpu_custom_call.1} parent=0 // pred_region
    _
  $region41: #{tpu_custom_call.1} parent=0 // pred_fallthru
    _
  // Predicated region
  $region42: #{tpu_custom_call.1} parent=0 // pred_check
    _
  $region43: #{tpu_custom_call.1} parent=0 // pred_check_branch
    %41 = sbr.rel (0) target = $region45
  $region44: #{tpu_custom_call.1} parent=0 // pred_region
    _
  $region45: #{tpu_custom_call.1} parent=0 // pred_fallthru
    _
  // Predicated region
  $region46: #{tpu_custom_call.1} parent=0 // pred_check
    _
  $region47: #{tpu_custom_call.1} parent=0 // pred_check_branch
    %43 = sbr.rel (0) target = $region49
  $region48: #{tpu_custom_call.1} parent=0 // pred_region
    _
  $region49: #{tpu_custom_call.1} parent=0 // pred_fallthru
    _
  // Predicated region
  $region50: #{tpu_custom_call.1} parent=0 // pred_check
    _
  $region51: #{tpu_custom_call.1} parent=0 // pred_check_branch
    %45 = sbr.rel (0) target = $region53
  $region52: #{tpu_custom_call.1} parent=0 // pred_region
    _
  $region53: #{tpu_custom_call.1} parent=0 // pred_fallthru
    _
  %v47 = vld [vmem:[%s1] sm:$0x3]
  %v48 = vld [vmem:[%s1 + $0x2] sm:$0x3]
  %v49 = vunpack.c.0.s8 %v47
  %v50 = vunpack.c.0.s8 %v48
  %v51 = vcvt.s32.f32 %v49
  %v52 = vcvt.s32.f32 %v50
  %v53 = vsub.f32 %v51, 1.0
  %v54 = vsub.f32 %v52, 1.0
  %v55 = vmul.f32 %v53, 1e+30
  %v56 = vmul.f32 %v54, 1e+30
  %v57 = vld [vmem:[%s0] sm:$0xff]
  %v58 = vld [vmem:[%s0 + $0x8] sm:$0xff]
  %v59 = vpack.c.bf16 %v58, %v57
  %v60 = vld [vmem:[%s3] sm:$0xf]
  %vm61 = vcmask 64512
  %v63 = vsel %vm61, %v59, 0
  %vm65 = vcmask 1043456
  %v67 = vsel %vm65, %v60, 0
  %69 = vmatprep.subr.bf16.mxu0 0
  %70 = vmatpush1.bf16.msra.mxu0 %v67
  %71 = vmatprep.subr.bf16.mxu0 0
  %72 = vmatpush1.bf16.msra.mxu0 0
  %73 = vmatprep.subr.bf16.mxu0 0
  %74 = vmatpush1.bf16.msra.mxu0 0
  %75 = vmatprep.subr.bf16.mxu0 0
  %76 = vmatpush1.bf16.msra.mxu0 0
  %77 = vmatprep.subr.bf16.mxu0 0
  %78 = vmatpush1.bf16.msra.mxu0 0
  %79 = vmatprep.subr.bf16.mxu0 0
  %80 = vmatpush1.bf16.msra.mxu0 0
  %81 = vmatprep.subr.bf16.mxu0 0
  %82 = vmatpush1.bf16.msra.mxu0 0
  %83 = vmatprep.subr.bf16.mxu0 0
  %84 = vmatpush1.bf16.msra.mxu0 0
  %85 = vmatprep.subr.bf16.mxu0 0
  %86 = vmatpush1.bf16.msra.mxu0 0
  %87 = vmatprep.subr.bf16.mxu0 0
  %88 = vmatpush1.bf16.msra.mxu0 0
  %89 = vmatprep.subr.bf16.mxu0 0
  %90 = vmatpush1.bf16.msra.mxu0 0
  %91 = vmatprep.subr.bf16.mxu0 0
  %92 = vmatpush1.bf16.msra.mxu0 0
  %93 = vmatprep.subr.bf16.mxu0 0
  %94 = vmatpush1.bf16.msra.mxu0 0
  %95 = vmatprep.subr.bf16.mxu0 0
  %96 = vmatpush1.bf16.msra.mxu0 0
  %97 = vmatprep.subr.bf16.mxu0 0
  %98 = vmatpush1.bf16.msra.mxu0 0
  %99 = vmatprep.subr.bf16.mxu0 0
  %100 = vmatpush1.bf16.msra.mxu0 0
  %101 = vmatprep.mubr.bf16.mxu0 0
  %102 = vmatmul.mubr.bf16.gmra.mrb[0].mxu0 %v63
  %v103 = vpop.f32.mrb[0].mxu0
  %v104 = vadd.f32 0.0, %v103
  %v105 = vpop.f32.mrb[0].mxu0
  %v106 = vpop.f32.mrb[0].mxu0
  %v107 = vadd.f32 0.0, %v106
  %v108 = vpop.f32.mrb[0].mxu0
  %109 = vdwg.mxu0
  %v110 = vpack.c.bf16 %v107, %v104
  %v111 = vld [vmem:[%s4] sm:$0xf]
  %v112 = vld [vmem:[%s4 + $0x4] sm:$0xf]
  %v113 = vld [vmem:[%s4 + $0x8] sm:$0xf]
  %v114 = vld [vmem:[%s4 + $0xc] sm:$0xf]
  %v115 = vld [vmem:[%s4 + $0x10] sm:$0xf]
  %v116 = vld [vmem:[%s4 + $0x14] sm:$0xf]
  %v117 = vld [vmem:[%s4 + $0x18] sm:$0xf]
  %v118 = vld [vmem:[%s4 + $0x1c] sm:$0xf]
  %v119 = vld [vmem:[%s4 + $0x20] sm:$0xf]
  %v120 = vld [vmem:[%s4 + $0x24] sm:$0xf]
  %v121 = vld [vmem:[%s4 + $0x28] sm:$0xf]
  %v122 = vld [vmem:[%s4 + $0x2c] sm:$0xf]
  %v123 = vld [vmem:[%s4 + $0x30] sm:$0xf]
  %v124 = vld [vmem:[%s4 + $0x34] sm:$0xf]
  %v125 = vld [vmem:[%s4 + $0x38] sm:$0xf]
  %v126 = vld [vmem:[%s4 + $0x3c] sm:$0xf]
  %v143 = vunpack.c.l.b16 %v111
  %v144 = vunpack.c.l.b16 %v112
  %v145 = vunpack.c.l.b16 %v113
  %v146 = vunpack.c.l.b16 %v114
  %v147 = vunpack.c.l.b16 %v115
  %v148 = vunpack.c.l.b16 %v116
  %v149 = vunpack.c.l.b16 %v117
  %v150 = vunpack.c.l.b16 %v118
  %v151 = vunpack.c.l.b16 %v119
  %v152 = vunpack.c.l.b16 %v120
  %v153 = vunpack.c.l.b16 %v121
  %v154 = vunpack.c.l.b16 %v122
  %v155 = vunpack.c.l.b16 %v123
  %v156 = vunpack.c.l.b16 %v124
  %v157 = vunpack.c.l.b16 %v125
  %v158 = vunpack.c.l.b16 %v126
  %v159 = vpack.c.b16 %v144, %v143
  %v160 = vpack.c.b16 %v146, %v145
  %v161 = vpack.c.b16 %v148, %v147
  %v162 = vpack.c.b16 %v150, %v149
  %v163 = vpack.c.b16 %v152, %v151
  %v164 = vpack.c.b16 %v154, %v153
  %v165 = vpack.c.b16 %v156, %v155
  %v166 = vpack.c.b16 %v158, %v157
  %175 = vmatprep.subr.bf16.mxu0 0
  %176 = vmatpush1.bf16.msra.mxu0 %v159
  %177 = vmatprep.subr.bf16.mxu0 0
  %178 = vmatpush1.bf16.msra.mxu0 %v160
  %179 = vmatprep.subr.bf16.mxu0 0
  %180 = vmatpush1.bf16.msra.mxu0 %v161
  %181 = vmatprep.subr.bf16.mxu0 0
  %182 = vmatpush1.bf16.msra.mxu0 %v162
  %183 = vmatprep.subr.bf16.mxu0 0
  %184 = vmatpush1.bf16.msra.mxu0 %v163
  %185 = vmatprep.subr.bf16.mxu0 0
  %186 = vmatpush1.bf16.msra.mxu0 %v164
  %187 = vmatprep.subr.bf16.mxu0 0
  %188 = vmatpush1.bf16.msra.mxu0 %v165
  %189 = vmatprep.subr.bf16.mxu0 0
  %190 = vmatpush1.bf16.msra.mxu0 %v166
  %191 = vmatprep.subr.bf16.mxu0 0
  %192 = vmatpush1.bf16.msra.mxu0 0
  %193 = vmatprep.subr.bf16.mxu0 0
  %194 = vmatpush1.bf16.msra.mxu0 0
  %195 = vmatprep.subr.bf16.mxu0 0
  %196 = vmatpush1.bf16.msra.mxu0 0
  %197 = vmatprep.subr.bf16.mxu0 0
  %198 = vmatpush1.bf16.msra.mxu0 0
  %199 = vmatprep.subr.bf16.mxu0 0
  %200 = vmatpush1.bf16.msra.mxu0 0
  %201 = vmatprep.subr.bf16.mxu0 0
  %202 = vmatpush1.bf16.msra.mxu0 0
  %203 = vmatprep.subr.bf16.mxu0 0
  %204 = vmatpush1.bf16.msra.mxu0 0
  %205 = vmatprep.subr.bf16.mxu0 0
  %206 = vmatpush1.bf16.msra.mxu0 0
  %207 = vmatprep.mubr.bf16.mxu0 0
  %208 = vmatmul.mubr.bf16.gmra.mrb[0].mxu0 %v110
  %v209 = vpop.f32.mrb[0].mxu0
  %v210 = vadd.f32 0.0, %v209
  %v211 = vpop.f32.mrb[0].mxu0
  %v212 = vpop.f32.mrb[0].mxu0
  %v213 = vadd.f32 0.0, %v212
  %v214 = vpop.f32.mrb[0].mxu0
  %215 = vdwg.mxu0
  %216 = vxpose.xlu0.b32.start [1/16] %v210, 128
  %217 = vxpose.xlu0.b32.cont [2/16] %v213, 128
  %218 = vxpose.xlu0.b32.cont [3/16] 0.0, 128
  %219 = vxpose.xlu0.b32.cont [4/16] 0.0, 128
  %220 = vxpose.xlu0.b32.cont [5/16] 0.0, 128
  %221 = vxpose.xlu0.b32.cont [6/16] 0.0, 128
  %222 = vxpose.xlu0.b32.cont [7/16] 0.0, 128
  %223 = vxpose.xlu0.b32.cont [8/16] 0.0, 128
  %224 = vxpose.xlu0.b32.cont [9/16] 0.0, 128
  %225 = vxpose.xlu0.b32.cont [10/16] 0.0, 128
  %226 = vxpose.xlu0.b32.cont [11/16] 0.0, 128
  %227 = vxpose.xlu0.b32.cont [12/16] 0.0, 128
  %228 = vxpose.xlu0.b32.cont [13/16] 0.0, 128
  %229 = vxpose.xlu0.b32.cont [14/16] 0.0, 128
  %230 = vxpose.xlu0.b32.cont [15/16] 0.0, 128
  %231 = vxpose.xlu0.b32.end [16/16] 0.0, 128
  %v232 = vpop.trf.xlu0
  %v233 = vpop.trf.xlu0
  %v234 = vpop.trf.xlu0
  %v235 = vpop.trf.xlu0
  %v236 = vpop.trf.xlu0
  %v237 = vpop.trf.xlu0
  %v238 = vpop.trf.xlu0
  %v239 = vpop.trf.xlu0
  %v240 = vpop.trf.xlu0
  %v241 = vpop.trf.xlu0
  %v242 = vpop.trf.xlu0
  %v243 = vpop.trf.xlu0
  %v244 = vpop.trf.xlu0
  %v245 = vpop.trf.xlu0
  %v246 = vpop.trf.xlu0
  %v247 = vpop.trf.xlu0
  %249 = vset.pattern.permute.xlu0 1
  %250 = vperm.xlu0 %249, %v210
  %v251 = vpop.permute.xlu0 %250
  %254 = vset.pattern.permute.xlu0 1
  %255 = vperm.xlu0 %254, %v213
  %v256 = vpop.permute.xlu0 %255
  %v258 = vlaneseq
  %v259 = vshrl.u32 %v258, 7
  %v260 = vsub.s32 0, %v259
  %v261 = vrot.slane %v232, %v260
  %v262 = vadd.f32 %v251, %v261
  %v263 = vadd.f32 %v256, %v261
  %v264 = vmul.f32 %v262, 0.2
  %v265 = vmul.f32 %v263, 0.2
  %v266 = vmax.f32 %v262, %v264
  %v267 = vmax.f32 %v263, %v265
  %v268 = vadd.f32 %v266, %v55
  %v269 = vadd.f32 %v267, %v56
  %vm270 = vcmask 130048
  %v271 = vsel %vm270, %v268, -inf
  %272 = vmax.xlane.f32.xlu0 %v271
  %v273 = vpop.xlane.xlu0 %272
  %v274 = vsel %vm270, %v269, -inf
  %275 = vmax.xlane.f32.xlu0 %v274
  %v276 = vpop.xlane.xlu0 %275
  %v277 = vsub.f32 %v268, %v273
  %v278 = vsub.f32 %v269, %v276
  %v279 = vmul.f32 %v277, 1.442695
  %v280 = vpow.pop %v279
  %v281 = vmul.f32 %v278, 1.442695
  %v282 = vpow.pop %v281
  %v283 = vsel %vm270, %v280, 0.0
  %284 = vadd.xlane.f32.xlu0 %v283
  %v285 = vpop.xlane.xlu0 %284
  %v286 = vsel %vm270, %v282, 0.0
  %287 = vadd.xlane.f32.xlu0 %v286
  %v288 = vpop.xlane.xlu0 %287
  %v289 = vpack.c.bf16 %v282, %v280
  %v291 = vsel %vm270, %v289, 0
  %293 = vmatprep.subr.bf16.mxu0 0
  %294 = vmatpush1.bf16.msra.mxu0 %v110
  %295 = vmatprep.subr.bf16.mxu0 0
  %296 = vmatpush1.bf16.msra.mxu0 0
  %297 = vmatprep.subr.bf16.mxu0 0
  %298 = vmatpush1.bf16.msra.mxu0 0
  %299 = vmatprep.subr.bf16.mxu0 0
  %300 = vmatpush1.bf16.msra.mxu0 0
  %301 = vmatprep.subr.bf16.mxu0 0
  %302 = vmatpush1.bf16.msra.mxu0 0
  %303 = vmatprep.subr.bf16.mxu0 0
  %304 = vmatpush1.bf16.msra.mxu0 0
  %305 = vmatprep.subr.bf16.mxu0 0
  %306 = vmatpush1.bf16.msra.mxu0 0
  %307 = vmatprep.subr.bf16.mxu0 0
  %308 = vmatpush1.bf16.msra.mxu0 0
  %309 = vmatprep.subr.bf16.mxu0 0
  %310 = vmatpush1.bf16.msra.mxu0 0
  %311 = vmatprep.subr.bf16.mxu0 0
  %312 = vmatpush1.bf16.msra.mxu0 0
  %313 = vmatprep.subr.bf16.mxu0 0
  %314 = vmatpush1.bf16.msra.mxu0 0
  %315 = vmatprep.subr.bf16.mxu0 0
  %316 = vmatpush1.bf16.msra.mxu0 0
  %317 = vmatprep.subr.bf16.mxu0 0
  %318 = vmatpush1.bf16.msra.mxu0 0
  %319 = vmatprep.subr.bf16.mxu0 0
  %320 = vmatpush1.bf16.msra.mxu0 0
  %321 = vmatprep.subr.bf16.mxu0 0
  %322 = vmatpush1.bf16.msra.mxu0 0
  %323 = vmatprep.subr.bf16.mxu0 0
  %324 = vmatpush1.bf16.msra.mxu0 0
  %325 = vmatprep.mubr.bf16.mxu0 0
  %326 = vmatmul.mubr.bf16.gmra.mrb[0].mxu0 %v291
  %v327 = vpop.f32.mrb[0].mxu0
  %v328 = vadd.f32 0.0, %v327
  %v329 = vpop.f32.mrb[0].mxu0
  %v330 = vpop.f32.mrb[0].mxu0
  %v331 = vadd.f32 0.0, %v330
  %v332 = vpop.f32.mrb[0].mxu0
  %333 = vdwg.mxu0
  %v334 = vld [vmem:[%s5] sm:$0x1]
  %v335 = vrcp.pop %v285
  %v336 = vrcp.pop %v288
  %v337 = vmul.f32 %v328, %v335
  %v338 = vmul.f32 %v331, %v336
  %v340 = vlaneseq
  %v341 = vshrl.u32 %v340, 7
  %v342 = vsub.s32 0, %v341
  %v343 = vrot.slane %v334, %v342
  %v345 = vadd.f32 %v337, %v343
  %v346 = vadd.f32 %v338, %v343
  %v347 = vmax.f32 %v345, 0.0
  %v348 = vmax.f32 %v346, 0.0
  %v349 = vpack.c.bf16 %v348, %v347
  %v350 = vld [vmem:[%s6] sm:$0xf]
  %v351 = vld [vmem:[%s6 + $0x4] sm:$0xf]
  %v352 = vld [vmem:[%s6 + $0x8] sm:$0xf]
  %v353 = vld [vmem:[%s6 + $0xc] sm:$0xf]
  %v354 = vld [vmem:[%s6 + $0x10] sm:$0xf]
  %v355 = vld [vmem:[%s6 + $0x14] sm:$0xf]
  %v356 = vld [vmem:[%s6 + $0x18] sm:$0xf]
  %v357 = vld [vmem:[%s6 + $0x1c] sm:$0xf]
  %v358 = vld [vmem:[%s6 + $0x20] sm:$0xf]
  %v359 = vld [vmem:[%s6 + $0x24] sm:$0xf]
  %v360 = vld [vmem:[%s6 + $0x28] sm:$0xf]
  %v361 = vld [vmem:[%s6 + $0x2c] sm:$0xf]
  %v362 = vld [vmem:[%s6 + $0x30] sm:$0xf]
  %v363 = vld [vmem:[%s6 + $0x34] sm:$0xf]
  %v364 = vld [vmem:[%s6 + $0x38] sm:$0xf]
  %v365 = vld [vmem:[%s6 + $0x3c] sm:$0xf]
  %v382 = vunpack.c.l.b16 %v350
  %v383 = vunpack.c.l.b16 %v351
  %v384 = vunpack.c.l.b16 %v352
  %v385 = vunpack.c.l.b16 %v353
  %v386 = vunpack.c.l.b16 %v354
  %v387 = vunpack.c.l.b16 %v355
  %v388 = vunpack.c.l.b16 %v356
  %v389 = vunpack.c.l.b16 %v357
  %v390 = vunpack.c.l.b16 %v358
  %v391 = vunpack.c.l.b16 %v359
  %v392 = vunpack.c.l.b16 %v360
  %v393 = vunpack.c.l.b16 %v361
  %v394 = vunpack.c.l.b16 %v362
  %v395 = vunpack.c.l.b16 %v363
  %v396 = vunpack.c.l.b16 %v364
  %v397 = vunpack.c.l.b16 %v365
  %v398 = vpack.c.b16 %v383, %v382
  %v399 = vpack.c.b16 %v385, %v384
  %v400 = vpack.c.b16 %v387, %v386
  %v401 = vpack.c.b16 %v389, %v388
  %v402 = vpack.c.b16 %v391, %v390
  %v403 = vpack.c.b16 %v393, %v392
  %v404 = vpack.c.b16 %v395, %v394
  %v405 = vpack.c.b16 %v397, %v396
  %414 = vmatprep.subr.bf16.mxu0 0
  %415 = vmatpush1.bf16.msra.mxu0 %v398
  %416 = vmatprep.subr.bf16.mxu0 0
  %417 = vmatpush1.bf16.msra.mxu0 %v399
  %418 = vmatprep.subr.bf16.mxu0 0
  %419 = vmatpush1.bf16.msra.mxu0 %v400
  %420 = vmatprep.subr.bf16.mxu0 0
  %421 = vmatpush1.bf16.msra.mxu0 %v401
  %422 = vmatprep.subr.bf16.mxu0 0
  %423 = vmatpush1.bf16.msra.mxu0 %v402
  %424 = vmatprep.subr.bf16.mxu0 0
  %425 = vmatpush1.bf16.msra.mxu0 %v403
  %426 = vmatprep.subr.bf16.mxu0 0
  %427 = vmatpush1.bf16.msra.mxu0 %v404
  %428 = vmatprep.subr.bf16.mxu0 0
  %429 = vmatpush1.bf16.msra.mxu0 %v405
  %430 = vmatprep.subr.bf16.mxu0 0
  %431 = vmatpush1.bf16.msra.mxu0 0
  %432 = vmatprep.subr.bf16.mxu0 0
  %433 = vmatpush1.bf16.msra.mxu0 0
  %434 = vmatprep.subr.bf16.mxu0 0
  %435 = vmatpush1.bf16.msra.mxu0 0
  %436 = vmatprep.subr.bf16.mxu0 0
  %437 = vmatpush1.bf16.msra.mxu0 0
  %438 = vmatprep.subr.bf16.mxu0 0
  %439 = vmatpush1.bf16.msra.mxu0 0
  %440 = vmatprep.subr.bf16.mxu0 0
  %441 = vmatpush1.bf16.msra.mxu0 0
  %442 = vmatprep.subr.bf16.mxu0 0
  %443 = vmatpush1.bf16.msra.mxu0 0
  %444 = vmatprep.subr.bf16.mxu0 0
  %445 = vmatpush1.bf16.msra.mxu0 0
  %446 = vmatprep.mubr.bf16.mxu0 0
  %447 = vmatmul.mubr.bf16.gmra.mrb[0].mxu0 %v349
  %v448 = vpop.f32.mrb[0].mxu0
  %v449 = vadd.f32 0.0, %v448
  %v450 = vpop.f32.mrb[0].mxu0
  %v451 = vpop.f32.mrb[0].mxu0
  %v452 = vadd.f32 0.0, %v451
  %v453 = vpop.f32.mrb[0].mxu0
  %454 = vdwg.mxu0
  %v455 = vpack.c.bf16 %v452, %v449
  %v456 = vld [vmem:[%s7] sm:$0xf]
  %v457 = vld [vmem:[%s7 + $0x4] sm:$0xf]
  %v458 = vld [vmem:[%s7 + $0x8] sm:$0xf]
  %v459 = vld [vmem:[%s7 + $0xc] sm:$0xf]
  %v460 = vld [vmem:[%s7 + $0x10] sm:$0xf]
  %v461 = vld [vmem:[%s7 + $0x14] sm:$0xf]
  %v462 = vld [vmem:[%s7 + $0x18] sm:$0xf]
  %v463 = vld [vmem:[%s7 + $0x1c] sm:$0xf]
  %v464 = vld [vmem:[%s7 + $0x20] sm:$0xf]
  %v465 = vld [vmem:[%s7 + $0x24] sm:$0xf]
  %v466 = vld [vmem:[%s7 + $0x28] sm:$0xf]
  %v467 = vld [vmem:[%s7 + $0x2c] sm:$0xf]
  %v468 = vld [vmem:[%s7 + $0x30] sm:$0xf]
  %v469 = vld [vmem:[%s7 + $0x34] sm:$0xf]
  %v470 = vld [vmem:[%s7 + $0x38] sm:$0xf]
  %v471 = vld [vmem:[%s7 + $0x3c] sm:$0xf]
  %v488 = vunpack.c.l.b16 %v456
  %v489 = vunpack.c.l.b16 %v457
  %v490 = vunpack.c.l.b16 %v458
  %v491 = vunpack.c.l.b16 %v459
  %v492 = vunpack.c.l.b16 %v460
  %v493 = vunpack.c.l.b16 %v461
  %v494 = vunpack.c.l.b16 %v462
  %v495 = vunpack.c.l.b16 %v463
  %v496 = vunpack.c.l.b16 %v464
  %v497 = vunpack.c.l.b16 %v465
  %v498 = vunpack.c.l.b16 %v466
  %v499 = vunpack.c.l.b16 %v467
  %v500 = vunpack.c.l.b16 %v468
  %v501 = vunpack.c.l.b16 %v469
  %v502 = vunpack.c.l.b16 %v470
  %v503 = vunpack.c.l.b16 %v471
  %v504 = vpack.c.b16 %v489, %v488
  %v505 = vpack.c.b16 %v491, %v490
  %v506 = vpack.c.b16 %v493, %v492
  %v507 = vpack.c.b16 %v495, %v494
  %v508 = vpack.c.b16 %v497, %v496
  %v509 = vpack.c.b16 %v499, %v498
  %v510 = vpack.c.b16 %v501, %v500
  %v511 = vpack.c.b16 %v503, %v502
  %520 = vmatprep.subr.bf16.mxu0 0
  %521 = vmatpush1.bf16.msra.mxu0 %v504
  %522 = vmatprep.subr.bf16.mxu0 0
  %523 = vmatpush1.bf16.msra.mxu0 %v505
  %524 = vmatprep.subr.bf16.mxu0 0
  %525 = vmatpush1.bf16.msra.mxu0 %v506
  %526 = vmatprep.subr.bf16.mxu0 0
  %527 = vmatpush1.bf16.msra.mxu0 %v507
  %528 = vmatprep.subr.bf16.mxu0 0
  %529 = vmatpush1.bf16.msra.mxu0 %v508
  %530 = vmatprep.subr.bf16.mxu0 0
  %531 = vmatpush1.bf16.msra.mxu0 %v509
  %532 = vmatprep.subr.bf16.mxu0 0
  %533 = vmatpush1.bf16.msra.mxu0 %v510
  %534 = vmatprep.subr.bf16.mxu0 0
  %535 = vmatpush1.bf16.msra.mxu0 %v511
  %536 = vmatprep.subr.bf16.mxu0 0
  %537 = vmatpush1.bf16.msra.mxu0 0
  %538 = vmatprep.subr.bf16.mxu0 0
  %539 = vmatpush1.bf16.msra.mxu0 0
  %540 = vmatprep.subr.bf16.mxu0 0
  %541 = vmatpush1.bf16.msra.mxu0 0
  %542 = vmatprep.subr.bf16.mxu0 0
  %543 = vmatpush1.bf16.msra.mxu0 0
  %544 = vmatprep.subr.bf16.mxu0 0
  %545 = vmatpush1.bf16.msra.mxu0 0
  %546 = vmatprep.subr.bf16.mxu0 0
  %547 = vmatpush1.bf16.msra.mxu0 0
  %548 = vmatprep.subr.bf16.mxu0 0
  %549 = vmatpush1.bf16.msra.mxu0 0
  %550 = vmatprep.subr.bf16.mxu0 0
  %551 = vmatpush1.bf16.msra.mxu0 0
  %552 = vmatprep.mubr.bf16.mxu0 0
  %553 = vmatmul.mubr.bf16.gmra.mrb[0].mxu0 %v455
  %v554 = vpop.f32.mrb[0].mxu0
  %v555 = vadd.f32 0.0, %v554
  %v556 = vpop.f32.mrb[0].mxu0
  %v557 = vpop.f32.mrb[0].mxu0
  %v558 = vadd.f32 0.0, %v557
  %v559 = vpop.f32.mrb[0].mxu0
  %560 = vdwg.mxu0
  %561 = vxpose.xlu0.b32.start [1/16] %v555, 128
  %562 = vxpose.xlu0.b32.cont [2/16] %v558, 128
  %563 = vxpose.xlu0.b32.cont [3/16] 0.0, 128
  %564 = vxpose.xlu0.b32.cont [4/16] 0.0, 128
  %565 = vxpose.xlu0.b32.cont [5/16] 0.0, 128
  %566 = vxpose.xlu0.b32.cont [6/16] 0.0, 128
  %567 = vxpose.xlu0.b32.cont [7/16] 0.0, 128
  %568 = vxpose.xlu0.b32.cont [8/16] 0.0, 128
  %569 = vxpose.xlu0.b32.cont [9/16] 0.0, 128
  %570 = vxpose.xlu0.b32.cont [10/16] 0.0, 128
  %571 = vxpose.xlu0.b32.cont [11/16] 0.0, 128
  %572 = vxpose.xlu0.b32.cont [12/16] 0.0, 128
  %573 = vxpose.xlu0.b32.cont [13/16] 0.0, 128
  %574 = vxpose.xlu0.b32.cont [14/16] 0.0, 128
  %575 = vxpose.xlu0.b32.cont [15/16] 0.0, 128
  %576 = vxpose.xlu0.b32.end [16/16] 0.0, 128
  %v577 = vpop.trf.xlu0
  %v578 = vpop.trf.xlu0
  %v579 = vpop.trf.xlu0
  %v580 = vpop.trf.xlu0
  %v581 = vpop.trf.xlu0
  %v582 = vpop.trf.xlu0
  %v583 = vpop.trf.xlu0
  %v584 = vpop.trf.xlu0
  %v585 = vpop.trf.xlu0
  %v586 = vpop.trf.xlu0
  %v587 = vpop.trf.xlu0
  %v588 = vpop.trf.xlu0
  %v589 = vpop.trf.xlu0
  %v590 = vpop.trf.xlu0
  %v591 = vpop.trf.xlu0
  %v592 = vpop.trf.xlu0
  %594 = vset.pattern.permute.xlu0 1
  %595 = vperm.xlu0 %594, %v555
  %v596 = vpop.permute.xlu0 %595
  %599 = vset.pattern.permute.xlu0 1
  %600 = vperm.xlu0 %599, %v558
  %v601 = vpop.permute.xlu0 %600
  %v603 = vlaneseq
  %v604 = vshrl.u32 %v603, 7
  %v605 = vsub.s32 0, %v604
  %v606 = vrot.slane %v577, %v605
  %v607 = vadd.f32 %v596, %v606
  %v608 = vadd.f32 %v601, %v606
  %v609 = vmul.f32 %v607, 0.2
  %v610 = vmul.f32 %v608, 0.2
  %v611 = vmax.f32 %v607, %v609
  %v612 = vmax.f32 %v608, %v610
  %v613 = vadd.f32 %v611, %v55
  %v614 = vadd.f32 %v612, %v56
  %v615 = vsel %vm270, %v613, -inf
  %616 = vmax.xlane.f32.xlu0 %v615
  %v617 = vpop.xlane.xlu0 %616
  %v618 = vsel %vm270, %v614, -inf
  %619 = vmax.xlane.f32.xlu0 %v618
  %v620 = vpop.xlane.xlu0 %619
  %v621 = vsub.f32 %v613, %v617
  %v622 = vsub.f32 %v614, %v620
  %v623 = vmul.f32 %v621, 1.442695
  %v624 = vpow.pop %v623
  %v625 = vmul.f32 %v622, 1.442695
  %v626 = vpow.pop %v625
  %v627 = vsel %vm270, %v624, 0.0
  %628 = vadd.xlane.f32.xlu0 %v627
  %v629 = vpop.xlane.xlu0 %628
  %v630 = vsel %vm270, %v626, 0.0
  %631 = vadd.xlane.f32.xlu0 %v630
  %v632 = vpop.xlane.xlu0 %631
  %v633 = vpack.c.bf16 %v626, %v624
  %v635 = vsel %vm270, %v633, 0
  %637 = vmatprep.subr.bf16.mxu0 0
  %638 = vmatpush1.bf16.msra.mxu0 %v455
  %639 = vmatprep.subr.bf16.mxu0 0
  %640 = vmatpush1.bf16.msra.mxu0 0
  %641 = vmatprep.subr.bf16.mxu0 0
  %642 = vmatpush1.bf16.msra.mxu0 0
  %643 = vmatprep.subr.bf16.mxu0 0
  %644 = vmatpush1.bf16.msra.mxu0 0
  %645 = vmatprep.subr.bf16.mxu0 0
  %646 = vmatpush1.bf16.msra.mxu0 0
  %647 = vmatprep.subr.bf16.mxu0 0
  %648 = vmatpush1.bf16.msra.mxu0 0
  %649 = vmatprep.subr.bf16.mxu0 0
  %650 = vmatpush1.bf16.msra.mxu0 0
  %651 = vmatprep.subr.bf16.mxu0 0
  %652 = vmatpush1.bf16.msra.mxu0 0
  %653 = vmatprep.subr.bf16.mxu0 0
  %654 = vmatpush1.bf16.msra.mxu0 0
  %655 = vmatprep.subr.bf16.mxu0 0
  %656 = vmatpush1.bf16.msra.mxu0 0
  %657 = vmatprep.subr.bf16.mxu0 0
  %658 = vmatpush1.bf16.msra.mxu0 0
  %659 = vmatprep.subr.bf16.mxu0 0
  %660 = vmatpush1.bf16.msra.mxu0 0
  %661 = vmatprep.subr.bf16.mxu0 0
  %662 = vmatpush1.bf16.msra.mxu0 0
  %663 = vmatprep.subr.bf16.mxu0 0
  %664 = vmatpush1.bf16.msra.mxu0 0
  %665 = vmatprep.subr.bf16.mxu0 0
  %666 = vmatpush1.bf16.msra.mxu0 0
  %667 = vmatprep.subr.bf16.mxu0 0
  %668 = vmatpush1.bf16.msra.mxu0 0
  %669 = vmatprep.mubr.bf16.mxu0 0
  %670 = vmatmul.mubr.bf16.gmra.mrb[0].mxu0 %v635
  %v671 = vpop.f32.mrb[0].mxu0
  %v672 = vadd.f32 0.0, %v671
  %v673 = vpop.f32.mrb[0].mxu0
  %v674 = vpop.f32.mrb[0].mxu0
  %v675 = vadd.f32 0.0, %v674
  %v676 = vpop.f32.mrb[0].mxu0
  %677 = vdwg.mxu0
  %v678 = vld [vmem:[%s8] sm:$0x1]
  %v679 = vrcp.pop %v629
  %v680 = vrcp.pop %v632
  %v681 = vmul.f32 %v672, %v679
  %v682 = vmul.f32 %v675, %v680
  %v684 = vlaneseq
  %v685 = vshrl.u32 %v684, 7
  %v686 = vsub.s32 0, %v685
  %v687 = vrot.slane %v678, %v686
  %v689 = vadd.f32 %v681, %v687
  %v690 = vadd.f32 %v682, %v687
  %v691 = vmax.f32 %v689, 0.0
  %v692 = vmax.f32 %v690, 0.0
  %v693 = vld [vmem:[%s2] sm:$0x3]
  %v695 = vsel %vm270, %v693, 0
  %697 = vmatprep.subr.mxu0 0.0
  %698 = vmatpush1.msra.mxu0 %v691
  %699 = vmatprep.subr.mxu0 0.0
  %700 = vmatpush1.msra.mxu0 %v692
  %701 = vmatprep.subr.mxu0 0.0
  %702 = vmatpush1.msra.mxu0 0.0
  %703 = vmatprep.subr.mxu0 0.0
  %704 = vmatpush1.msra.mxu0 0.0
  %705 = vmatprep.subr.mxu0 0.0
  %706 = vmatpush1.msra.mxu0 0.0
  %707 = vmatprep.subr.mxu0 0.0
  %708 = vmatpush1.msra.mxu0 0.0
  %709 = vmatprep.subr.mxu0 0.0
  %710 = vmatpush1.msra.mxu0 0.0
  %711 = vmatprep.subr.mxu0 0.0
  %712 = vmatpush1.msra.mxu0 0.0
  %713 = vmatprep.subr.mxu0 0.0
  %714 = vmatpush1.msra.mxu0 0.0
  %715 = vmatprep.subr.mxu0 0.0
  %716 = vmatpush1.msra.mxu0 0.0
  %717 = vmatprep.subr.mxu0 0.0
  %718 = vmatpush1.msra.mxu0 0.0
  %719 = vmatprep.subr.mxu0 0.0
  %720 = vmatpush1.msra.mxu0 0.0
  %721 = vmatprep.subr.mxu0 0.0
  %722 = vmatpush1.msra.mxu0 0.0
  %723 = vmatprep.subr.mxu0 0.0
  %724 = vmatpush1.msra.mxu0 0.0
  %725 = vmatprep.subr.mxu0 0.0
  %726 = vmatpush1.msra.mxu0 0.0
  %727 = vmatprep.subr.mxu0 0.0
  %728 = vmatpush1.msra.mxu0 0.0
  %729 = vmatprep.subr.mxu0 0.0
  %730 = vmatpush1.msra.mxu0 0.0
  %731 = vmatprep.subr.mxu0 0.0
  %732 = vmatpush1.msra.mxu0 0.0
  %733 = vmatprep.subr.mxu0 0.0
  %734 = vmatpush1.msra.mxu0 0.0
  %735 = vmatprep.subr.mxu0 0.0
  %736 = vmatpush1.msra.mxu0 0.0
  %737 = vmatprep.subr.mxu0 0.0
  %738 = vmatpush1.msra.mxu0 0.0
  %739 = vmatprep.subr.mxu0 0.0
  %740 = vmatpush1.msra.mxu0 0.0
  %741 = vmatprep.subr.mxu0 0.0
  %742 = vmatpush1.msra.mxu0 0.0
  %743 = vmatprep.subr.mxu0 0.0
  %744 = vmatpush1.msra.mxu0 0.0
  %745 = vmatprep.subr.mxu0 0.0
  %746 = vmatpush1.msra.mxu0 0.0
  %747 = vmatprep.subr.mxu0 0.0
  %748 = vmatpush1.msra.mxu0 0.0
  %749 = vmatprep.subr.mxu0 0.0
  %750 = vmatpush1.msra.mxu0 0.0
  %751 = vmatprep.subr.mxu0 0.0
  %752 = vmatpush1.msra.mxu0 0.0
  %753 = vmatprep.subr.mxu0 0.0
  %754 = vmatpush1.msra.mxu0 0.0
  %755 = vmatprep.subr.mxu0 0.0
  %756 = vmatpush1.msra.mxu0 0.0
  %757 = vmatprep.subr.mxu0 0.0
  %758 = vmatpush1.msra.mxu0 0.0
  %759 = vmatprep.subr.mxu0 0.0
  %760 = vmatpush1.msra.mxu0 0.0
  %761 = vmatprep.mubr.f32.mxu0 0.0
  %762 = vmatmul.mubr.f32.gmra.mrb[0].mxu0 %v695
  %v763 = vpop.f32.mrb[0].mxu0
  %v764 = vadd.f32 0.0, %v763
  %v765 = vpop.f32.mrb[0].mxu0
  %766 = vdwg.mxu0
  %v767 = vpack.c.bf16 %v764, %v764
  %v768 = vld [vmem:[%s9] sm:$0xf]
  %v769 = vld [vmem:[%s9 + $0x4] sm:$0xf]
  %v770 = vld [vmem:[%s9 + $0x8] sm:$0xf]
  %v771 = vld [vmem:[%s9 + $0xc] sm:$0xf]
  %v772 = vld [vmem:[%s9 + $0x10] sm:$0xf]
  %v773 = vld [vmem:[%s9 + $0x14] sm:$0xf]
  %v774 = vld [vmem:[%s9 + $0x18] sm:$0xf]
  %v775 = vld [vmem:[%s9 + $0x1c] sm:$0xf]
  %v776 = vld [vmem:[%s9 + $0x20] sm:$0xf]
  %v777 = vld [vmem:[%s9 + $0x24] sm:$0xf]
  %v778 = vld [vmem:[%s9 + $0x28] sm:$0xf]
  %v779 = vld [vmem:[%s9 + $0x2c] sm:$0xf]
  %v780 = vld [vmem:[%s9 + $0x30] sm:$0xf]
  %v781 = vld [vmem:[%s9 + $0x34] sm:$0xf]
  %v782 = vld [vmem:[%s9 + $0x38] sm:$0xf]
  %v783 = vld [vmem:[%s9 + $0x3c] sm:$0xf]
  %v784 = vld [vmem:[%s10] sm:$0x1]
  %v786 = vlaneseq
  %v787 = vshrl.u32 %v786, 7
  %v788 = vsub.s32 0, %v787
  %v789 = vrot.slane %v784, %v788
  %v807 = vunpack.c.l.b16 %v768
  %v808 = vunpack.c.l.b16 %v769
  %v809 = vunpack.c.l.b16 %v770
  %v810 = vunpack.c.l.b16 %v771
  %v811 = vunpack.c.l.b16 %v772
  %v812 = vunpack.c.l.b16 %v773
  %v813 = vunpack.c.l.b16 %v774
  %v814 = vunpack.c.l.b16 %v775
  %v815 = vunpack.c.l.b16 %v776
  %v816 = vunpack.c.l.b16 %v777
  %v817 = vunpack.c.l.b16 %v778
  %v818 = vunpack.c.l.b16 %v779
  %v819 = vunpack.c.l.b16 %v780
  %v820 = vunpack.c.l.b16 %v781
  %v821 = vunpack.c.l.b16 %v782
  %v822 = vunpack.c.l.b16 %v783
  %v823 = vpack.c.b16 %v808, %v807
  %v824 = vpack.c.b16 %v810, %v809
  %v825 = vpack.c.b16 %v812, %v811
  %v826 = vpack.c.b16 %v814, %v813
  %v827 = vpack.c.b16 %v816, %v815
  %v828 = vpack.c.b16 %v818, %v817
  %v829 = vpack.c.b16 %v820, %v819
  %v830 = vpack.c.b16 %v822, %v821
  %839 = vmatprep.subr.bf16.mxu0 0
  %840 = vmatpush1.bf16.msra.mxu0 %v823
  %841 = vmatprep.subr.bf16.mxu0 0
  %842 = vmatpush1.bf16.msra.mxu0 %v824
  %843 = vmatprep.subr.bf16.mxu0 0
  %844 = vmatpush1.bf16.msra.mxu0 %v825
  %845 = vmatprep.subr.bf16.mxu0 0
  %846 = vmatpush1.bf16.msra.mxu0 %v826
  %847 = vmatprep.subr.bf16.mxu0 0
  %848 = vmatpush1.bf16.msra.mxu0 %v827
  %849 = vmatprep.subr.bf16.mxu0 0
  %850 = vmatpush1.bf16.msra.mxu0 %v828
  %851 = vmatprep.subr.bf16.mxu0 0
  %852 = vmatpush1.bf16.msra.mxu0 %v829
  %853 = vmatprep.subr.bf16.mxu0 0
  %854 = vmatpush1.bf16.msra.mxu0 %v830
  %855 = vmatprep.subr.bf16.mxu0 0
  %856 = vmatpush1.bf16.msra.mxu0 0
  %857 = vmatprep.subr.bf16.mxu0 0
  %858 = vmatpush1.bf16.msra.mxu0 0
  %859 = vmatprep.subr.bf16.mxu0 0
  %860 = vmatpush1.bf16.msra.mxu0 0
  %861 = vmatprep.subr.bf16.mxu0 0
  %862 = vmatpush1.bf16.msra.mxu0 0
  %863 = vmatprep.subr.bf16.mxu0 0
  %864 = vmatpush1.bf16.msra.mxu0 0
  %865 = vmatprep.subr.bf16.mxu0 0
  %866 = vmatpush1.bf16.msra.mxu0 0
  %867 = vmatprep.subr.bf16.mxu0 0
  %868 = vmatpush1.bf16.msra.mxu0 0
  %869 = vmatprep.subr.bf16.mxu0 0
  %870 = vmatpush1.bf16.msra.mxu0 0
  %871 = vmatprep.mubr.bf16.mxu0 0
  %872 = vmatmul.mubr.bf16.gmra.mrb[0].mxu0 %v767
  %v873 = vpop.f32.mrb[0].mxu0
  %v874 = vadd.f32 %v789, %v873
  %v875 = vpop.f32.mrb[0].mxu0
  %v876 = vpop.f32.mrb[0].mxu0
  %v877 = vpop.f32.mrb[0].mxu0
  %878 = vdwg.mxu0
  %v879 = vmax.f32 %v874, 0.0
  %v880 = vld [vmem:[%s11] sm:$0x1]
  %v882 = vlaneseq
  %v883 = vshrl.u32 %v882, 7
  %v884 = vsub.s32 0, %v883
  %v885 = vrot.slane %v880, %v884
  %v887 = vmul.f32 %v879, %v885
  %vm888 = vcmask 1041408
  %v889 = vsel %vm888, %v887, 0.0
  %890 = vadd.xlane.f32.xlu0 %v889
  %v891 = vpop.xlane.xlu0 %890
  %v892 = vld [vmem:[#allocation2] sm:$0x1]
  %v894 = vlaneseq
  %v895 = vshrl.u32 %v894, 7
  %v896 = vsub.s32 0, %v895
  %v897 = vrot.slane %v892, %v896
  %v899 = vadd.f32 %v891, %v897
  %vm900 = vcmask 1024
  %901 = vst.msk [vmem:[%s13] sm:$0x3] %vm900, %v899
  // Predicated region
  $region54: #{tpu_custom_call.1} parent=0 // pred_check
    _
  $region55: #{tpu_custom_call.1} parent=0 // pred_check_branch
    %903 = sbr.rel (0) target = $region57
  $region56: #{tpu_custom_call.1} parent=0 // pred_region
    _
  $region57: #{tpu_custom_call.1} parent=0 // pred_fallthru
    _
  // Predicated region
  $region58: #{tpu_custom_call.1} parent=0 // pred_check
    _
  $region59: #{tpu_custom_call.1} parent=0 // pred_check_branch
    %905 = sbr.rel (0) target = $region61
  $region60: #{tpu_custom_call.1} parent=0 // pred_region
    _
  $region61: #{tpu_custom_call.1} parent=0 // pred_fallthru
    _

</llo_original>
